<compile_context>
chip_gen: v7x
topology: tpu7x:2x2x1
jax: 0.10.0
libtpu: 0.0.40
codegen_flags: <defaults>
</compile_context>

<pallas_src>
import functools

import jax
import jax.numpy as jnp
from jax.experimental import pallas as pl
from jax.experimental.pallas import tpu as pltpu

LANE = 128                            # vreg lane width
BLOCK_ROWS = 2048                     # (2048, 128) f32 tile = 1 MiB per buffer
FUSED_MAX_BYTES = 2 * 1024 * 1024     # whole-tensor-resident fused path threshold
VMEM_LIMIT = 32 * 1024 * 1024         # safe scoped-VMEM request on v5e/v6e/v7x
_F32_MAX = 3.4028235e38


def _valid_mask(shape, base_elem, n_valid):
    """Boolean mask of flat element index < n_valid for a (rows, LANE) block."""
    row = jax.lax.broadcasted_iota(jnp.int32, shape, 0)
    col = jax.lax.broadcasted_iota(jnp.int32, shape, 1)
    return (base_elem + row * LANE + col) < n_valid


# ----------------------------------------------------------------------------
# Kernel 1: global min / max over large (BLOCK_ROWS, LANE) tiles.
# Elementwise running min/max lives in VMEM scratch; the cross-lane reduce and
# the (1, 1) scalar stores happen only in the epilogue (last grid step).
# ----------------------------------------------------------------------------
def _minmax_kernel(x_ref, min_ref, max_ref, min_acc, max_acc, *,
                   needs_mask, n_valid, block_rows):
    i = pl.program_id(0)

    @pl.when(i == 0)
    def _():
        min_acc[...] = jnp.full_like(min_acc, _F32_MAX)
        max_acc[...] = jnp.full_like(max_acc, -_F32_MAX)

    x = x_ref[...].astype(jnp.float32)
    if needs_mask:
        mask = _valid_mask(x.shape, i * (block_rows * LANE), n_valid)
        x_lo = jnp.where(mask, x, _F32_MAX)
        x_hi = jnp.where(mask, x, -_F32_MAX)
    else:
        x_lo = x_hi = x

    min_acc[...] = jnp.minimum(min_acc[...], x_lo)   # pure VPU per step
    max_acc[...] = jnp.maximum(max_acc[...], x_hi)

    @pl.when(i == pl.num_programs(0) - 1)
    def _():
        min_ref[0, 0] = jnp.min(min_acc[...])        # XLU reduce only once
        max_ref[0, 0] = jnp.max(max_acc[...])


def _global_minmax(x2d, n_valid):
    rows, _ = x2d.shape
    block_rows = min(BLOCK_ROWS, rows)
    n_tiles = pl.cdiv(rows, block_rows)
    needs_mask = (rows * LANE != n_valid) or (rows % block_rows != 0)
    kernel = functools.partial(_minmax_kernel, needs_mask=needs_mask,
                               n_valid=n_valid, block_rows=block_rows)
    mn, mx = pl.pallas_call(
        kernel,
        out_shape=(jax.ShapeDtypeStruct((1, 1), jnp.float32),
                   jax.ShapeDtypeStruct((1, 1), jnp.float32)),
        grid=(n_tiles,),
        in_specs=[pl.BlockSpec((block_rows, LANE), lambda i: (i, 0))],
        out_specs=(pl.BlockSpec((1, 1), lambda i: (0, 0)),
                   pl.BlockSpec((1, 1), lambda i: (0, 0))),
        scratch_shapes=[pltpu.VMEM((block_rows, LANE), jnp.float32),
                        pltpu.VMEM((block_rows, LANE), jnp.float32)],
        compiler_params=pltpu.CompilerParams(
            dimension_semantics=("arbitrary",),
            vmem_limit_bytes=VMEM_LIMIT),
    )(x2d)
    return mn[0, 0], mx[0, 0]


# ----------------------------------------------------------------------------
# Kernel 2: elementwise fake-quantize with precomputed scale / zp / inv_scale
# (multiply instead of divide). Parameters arrive as SMEM scalars.
# ----------------------------------------------------------------------------
def _quant_kernel(params_ref, x_ref, o_ref, *, qmin, qmax):
    scale = params_ref[0]
    zp = params_ref[1]
    inv_scale = params_ref[2]
    x = x_ref[...].astype(jnp.float32)
    q = jnp.clip(jnp.round(x * scale - zp), qmin, qmax)
    o_ref[...] = ((q + zp) * inv_scale).astype(o_ref.dtype)


def _quantize(x2d, scale, zero_point, inv_scale, activation_bit):
    rows, _ = x2d.shape
    block_rows = min(BLOCK_ROWS, rows)
    n_tiles = pl.cdiv(rows, block_rows)
    qmin = float(-(2 ** (activation_bit - 1)))
    qmax = float(2 ** (activation_bit - 1) - 1)
    params = jnp.stack([scale, zero_point, inv_scale]).astype(jnp.float32)
    kernel = functools.partial(_quant_kernel, qmin=qmin, qmax=qmax)
    return pl.pallas_call(
        kernel,
        out_shape=jax.ShapeDtypeStruct(x2d.shape, x2d.dtype),
        grid=(n_tiles,),
        in_specs=[
            pl.BlockSpec(memory_space=pltpu.MemorySpace.SMEM),     # params (3,)
            pl.BlockSpec((block_rows, LANE), lambda i: (i, 0)),    # x tile
        ],
        out_specs=pl.BlockSpec((block_rows, LANE), lambda i: (i, 0)),
        compiler_params=pltpu.CompilerParams(
            dimension_semantics=("parallel",),
            vmem_limit_bytes=VMEM_LIMIT),
    )(params, x2d)


# ----------------------------------------------------------------------------
# Kernel 3: fused single-pass QuantAct for activations that fit in VMEM.
# Reads x once; min/max, running-stat update, scale/zp derivation and the
# quantization all happen inside one kernel.
# ----------------------------------------------------------------------------
def _fused_kernel(bufs_ref, x_ref, o_ref, min_ref, max_ref, *,
                  k, running_stat, needs_mask, n_valid):
    x = x_ref[...].astype(jnp.float32)
    if needs_mask:
        mask = _valid_mask(x.shape, 0, n_valid)
        x_lo = jnp.where(mask, x, _F32_MAX)
        x_hi = jnp.where(mask, x, -_F32_MAX)
    else:
        x_lo = x_hi = x

    data_min = jnp.min(x_lo, keepdims=True)      # (1, 1)
    data_max = jnp.max(x_hi, keepdims=True)      # (1, 1)

    buf_min = bufs_ref[0]
    buf_max = bufs_ref[1]
    if running_stat:
        new_min = jnp.minimum(data_min, buf_min)
        new_max = jnp.maximum(data_max, buf_max)
    else:
        zeros = jnp.zeros((1, 1), jnp.float32)
        new_min = zeros + buf_min
        new_max = zeros + buf_max

    min_ref[...] = new_min
    max_ref[...] = new_max

    # AsymmetricQuantFunction fallback: degenerate range -> use data min/max.
    degenerate = new_min == new_max
    q_min = jnp.where(degenerate, data_min, new_min)
    q_max = jnp.where(degenerate, data_max, new_max)

    n_levels = jnp.float32(2.0 ** k - 1.0)
    diff = jnp.maximum(q_max - q_min, 1e-8)
    scale = n_levels / diff
    zp = jnp.round(scale * q_min) + jnp.float32(2.0 ** (k - 1))
    inv_scale = diff / n_levels                  # multiply, not divide, per element

    qmin = jnp.float32(-(2 ** (k - 1)))
    qmax = jnp.float32(2 ** (k - 1) - 1)
    q = jnp.clip(jnp.round(x * scale - zp), qmin, qmax)
    o_ref[...] = ((q + zp) * inv_scale).astype(o_ref.dtype)


def _fused_quant_act(x2d, n_valid, x_min_buf, x_max_buf, activation_bit,
                     running_stat):
    rows, _ = x2d.shape
    needs_mask = rows * LANE != n_valid
    bufs = jnp.stack([x_min_buf, x_max_buf]).astype(jnp.float32)
    kernel = functools.partial(_fused_kernel, k=activation_bit,
                               running_stat=running_stat,
                               needs_mask=needs_mask, n_valid=n_valid)
    out2d, mn, mx = pl.pallas_call(
        kernel,
        out_shape=(jax.ShapeDtypeStruct(x2d.shape, x2d.dtype),
                   jax.ShapeDtypeStruct((1, 1), jnp.float32),
                   jax.ShapeDtypeStruct((1, 1), jnp.float32)),
        grid=(1,),
        in_specs=[
            pl.BlockSpec(memory_space=pltpu.MemorySpace.SMEM),   # buffers (2,)
            pl.BlockSpec((rows, LANE), lambda i: (0, 0)),        # whole x
        ],
        out_specs=(
            pl.BlockSpec((rows, LANE), lambda i: (0, 0)),
            pl.BlockSpec((1, 1), lambda i: (0, 0)),
            pl.BlockSpec((1, 1), lambda i: (0, 0)),
        ),
        compiler_params=pltpu.CompilerParams(
            dimension_semantics=("arbitrary",),
            vmem_limit_bytes=VMEM_LIMIT),
    )(bufs, x2d)
    return out2d, mn[0, 0], mx[0, 0]


# ----------------------------------------------------------------------------
# QuantAct.forward equivalent.
# ----------------------------------------------------------------------------
def quant_act_forward(x,
                      activation_bit=8,
                      x_min_buf=0.0,
                      x_max_buf=0.0,
                      running_stat=True,
                      full_precision_flag=False):
    """Returns (output, new_x_min, new_x_max) matching QuantAct semantics."""
    x_min_buf = jnp.asarray(x_min_buf, jnp.float32).reshape(())
    x_max_buf = jnp.asarray(x_max_buf, jnp.float32).reshape(())

    orig_shape = x.shape
    orig_dtype = x.dtype
    flat = x.reshape(-1)          # free (contiguous); dtype kept as-is
    n = flat.shape[0]

    # Only pad when n is not a lane multiple (rare); padded elements are masked
    # out of the min/max inside the kernels, so the pad value is irrelevant.
    # TODO(synk): handle a ragged lane tail fully in-kernel to avoid this copy.
    pad = (-n) % LANE
    if pad:
        flat = jnp.concatenate([flat, jnp.zeros((pad,), flat.dtype)])
    x2d = flat.reshape(-1, LANE)

    if full_precision_flag:
        if not running_stat:
            return x, x_min_buf, x_max_buf
        data_min, data_max = _global_minmax(x2d, n)
        return (x, jnp.minimum(x_min_buf, data_min),
                jnp.maximum(x_max_buf, data_max))

    # Fused single-pass path for VMEM-resident activations (read x once).
    if x2d.size * x2d.dtype.itemsize <= FUSED_MAX_BYTES:
        out2d, new_x_min, new_x_max = _fused_quant_act(
            x2d, n, x_min_buf, x_max_buf, activation_bit, running_stat)
        out_flat = out2d.reshape(-1)
        if pad:
            out_flat = out_flat[:n]
        return out_flat.reshape(orig_shape), new_x_min, new_x_max

    # Two-pass path for large activations.
    data_min, data_max = _global_minmax(x2d, n)
    if running_stat:
        new_x_min = jnp.minimum(x_min_buf, data_min)
        new_x_max = jnp.maximum(x_max_buf, data_max)
    else:
        new_x_min, new_x_max = x_min_buf, x_max_buf

    # AsymmetricQuantFunction fallback for a degenerate range.
    degenerate = new_x_min == new_x_max
    q_min = jnp.where(degenerate, data_min, new_x_min)
    q_max = jnp.where(degenerate, data_max, new_x_max)

    k = activation_bit
    n_levels = 2.0 ** k - 1.0
    diff = jnp.maximum(q_max - q_min, 1e-8)
    scale = n_levels / diff
    zero_point = jnp.round(scale * q_min) + 2.0 ** (k - 1)
    inv_scale = diff / n_levels

    out2d = _quantize(x2d, scale, zero_point, inv_scale, k)
    out_flat = out2d.reshape(-1)
    if pad:
        out_flat = out_flat[:n]
    return out_flat.reshape(orig_shape), new_x_min, new_x_max


# ----------------------------------------------------------------------------
# Pure-JAX reference for a correctness check.
# ----------------------------------------------------------------------------
def _reference(x, activation_bit, x_min_buf=0.0, x_max_buf=0.0):
    xf = x.astype(jnp.float32)
    x_min = jnp.minimum(jnp.float32(x_min_buf), jnp.min(xf))
    x_max = jnp.maximum(jnp.float32(x_max_buf), jnp.max(xf))
    k = activation_bit
    scale = (2.0 ** k - 1.0) / jnp.maximum(x_max - x_min, 1e-8)
    zp = jnp.round(scale * x_min) + 2.0 ** (k - 1)
    q = jnp.clip(jnp.round(scale * xf - zp),
                 -(2 ** (k - 1)), 2 ** (k - 1) - 1)
    return ((q + zp) / scale).astype(x.dtype)


if __name__ == "__main__":
    key = jax.random.PRNGKey(0)
    k1, k2 = jax.random.split(key)

    # Case 1: small NCHW activation -> fused single-pass VMEM-resident kernel.
    x_small = jax.random.normal(k1, (2, 4, 16, 16), dtype=jnp.float32)
    out_s, mn_s, mx_s = quant_act_forward(x_small, activation_bit=8)
    out_s = jax.block_until_ready(out_s)
    ref_s = _reference(x_small, activation_bit=8)
    assert out_s.shape == x_small.shape and out_s.dtype == x_small.dtype
    assert jnp.allclose(out_s, ref_s, atol=1e-5, rtol=1e-5)
    assert jnp.allclose(mn_s, jnp.minimum(0.0, jnp.min(x_small)))
    assert jnp.allclose(mx_s, jnp.maximum(0.0, jnp.max(x_small)))

    # Case 2: larger activation -> two-pass path with a ragged last row-tile
    # (4900 rows of 128 lanes, block of 2048 rows -> partial third block).
    x_big = jax.random.normal(k2, (2, 100, 56, 56), dtype=jnp.float32)
    out_b, mn_b, mx_b = quant_act_forward(x_big, activation_bit=8)
    out_b = jax.block_until_ready(out_b)
    ref_b = _reference(x_big, activation_bit=8)
    assert out_b.shape == x_big.shape and out_b.dtype == x_big.dtype
    assert jnp.allclose(out_b, ref_b, atol=1e-5, rtol=1e-5)
    assert jnp.allclose(mn_b, jnp.minimum(0.0, jnp.min(x_big)))
    assert jnp.allclose(mx_b, jnp.maximum(0.0, jnp.max(x_big)))

    print("KERNEL_OK")
</pallas_src>

<mosaic_0001>
module attributes {stable_mosaic.version = 11 : i64} {
  func.func @_fused_kernel(%arg0: i32, %arg1: memref<2xf32, #tpu.memory_space<smem>>, %arg2: memref<16x128xf32, #tpu.memory_space<vmem>>, %arg3: memref<16x128xf32, #tpu.memory_space<vmem>>, %arg4: memref<1x1xf32, #tpu.memory_space<vmem>>, %arg5: memref<1x1xf32, #tpu.memory_space<vmem>>) attributes {dimension_semantics = [#tpu.dimension_semantics<arbitrary>], iteration_bounds = array<i64: 1>, scalar_prefetch = 0 : i64, scratch_operands = 0 : i64, tpu.core_type = #tpu.core_type<tc>, window_params = [{transform_indices = @transform_0, window_bounds = array<i64: 2>}, {pipeline_mode = #tpu.pipeline_mode<synchronous>, transform_indices = @transform_1, window_bounds = array<i64: 16, 128>}, {pipeline_mode = #tpu.pipeline_mode<synchronous>, transform_indices = @transform_2, window_bounds = array<i64: 16, 128>}, {pipeline_mode = #tpu.pipeline_mode<synchronous>, transform_indices = @transform_3, window_bounds = array<i64: 1, 1>}, {pipeline_mode = #tpu.pipeline_mode<synchronous>, transform_indices = @transform_4, window_bounds = array<i64: 1, 1>}]} {
    %c0 = arith.constant 0 : index
    %c0_0 = arith.constant 0 : index
    %0 = vector.load %arg2[%c0, %c0_0] : memref<16x128xf32, #tpu.memory_space<vmem>>, vector<16x128xf32>
    %1 = vector.shape_cast %0 : vector<16x128xf32> to vector<1x16x128xf32>
    %cst = arith.constant dense<0x7F800000> : vector<1xf32>
    %2 = vector.multi_reduction <minimumf>, %1, %cst [1, 2] : vector<1x16x128xf32> to vector<1xf32>
    %3 = vector.shape_cast %2 : vector<1xf32> to vector<1x1x1xf32>
    %4 = vector.extract %3[0, 0, 0] : f32 from vector<1x1x1xf32>
    %5 = vector.broadcast %4 : f32 to vector<1x1xf32>
    %6 = vector.shape_cast %0 : vector<16x128xf32> to vector<1x16x128xf32>
    %cst_1 = arith.constant dense<0xFF800000> : vector<1xf32>
    %7 = vector.multi_reduction <maximumf>, %6, %cst_1 [1, 2] : vector<1x16x128xf32> to vector<1xf32>
    %8 = vector.shape_cast %7 : vector<1xf32> to vector<1x1x1xf32>
    %9 = vector.extract %8[0, 0, 0] : f32 from vector<1x1x1xf32>
    %10 = vector.broadcast %9 : f32 to vector<1x1xf32>
    %c0_2 = arith.constant 0 : index
    %11 = memref.load %arg1[%c0_2] : memref<2xf32, #tpu.memory_space<smem>>
    %c1 = arith.constant 1 : index
    %12 = memref.load %arg1[%c1] : memref<2xf32, #tpu.memory_space<smem>>
    %13 = vector.broadcast %11 : f32 to vector<1x1xf32>
    %14 = arith.minimumf %5, %13 : vector<1x1xf32>
    %15 = vector.broadcast %12 : f32 to vector<1x1xf32>
    %16 = arith.maximumf %10, %15 : vector<1x1xf32>
    %c0_3 = arith.constant 0 : index
    %c0_4 = arith.constant 0 : index
    %17 = vector.load %arg4[%c0_3, %c0_4] : memref<1x1xf32, #tpu.memory_space<vmem>>, vector<1x1xf32>
    tpu.vector_store %arg4[%c0_3, %c0_4], %14 {strides = array<i32>} : memref<1x1xf32, #tpu.memory_space<vmem>>, vector<1x1xf32>,
    %c0_5 = arith.constant 0 : index
    %c0_6 = arith.constant 0 : index
    %18 = vector.load %arg5[%c0_5, %c0_6] : memref<1x1xf32, #tpu.memory_space<vmem>>, vector<1x1xf32>
    tpu.vector_store %arg5[%c0_5, %c0_6], %16 {strides = array<i32>} : memref<1x1xf32, #tpu.memory_space<vmem>>, vector<1x1xf32>,
    %19 = arith.cmpf oeq, %14, %16 : vector<1x1xf32>
    %20 = arith.select %19, %5, %14 : vector<1x1xi1>, vector<1x1xf32>
    %21 = arith.select %19, %10, %16 : vector<1x1xi1>, vector<1x1xf32>
    %22 = arith.subf %21, %20 : vector<1x1xf32>
    %cst_7 = arith.constant 9.99999993E-9 : f32
    %23 = vector.broadcast %cst_7 : f32 to vector<1x1xf32>
    %24 = arith.maximumf %22, %23 : vector<1x1xf32>
    %cst_8 = arith.constant 2.550000e+02 : f32
    %25 = vector.broadcast %cst_8 : f32 to vector<1x1xf32>
    %26 = arith.divf %25, %24 : vector<1x1xf32>
    %27 = arith.mulf %26, %20 : vector<1x1xf32>
    %28 = math.roundeven %27 : vector<1x1xf32>
    %cst_9 = arith.constant 1.280000e+02 : f32
    %29 = vector.broadcast %cst_9 : f32 to vector<1x1xf32>
    %30 = arith.addf %28, %29 : vector<1x1xf32>
    %cst_10 = arith.constant 2.550000e+02 : f32
    %31 = vector.broadcast %cst_10 : f32 to vector<1x1xf32>
    %32 = arith.divf %24, %31 : vector<1x1xf32>
    %33 = vector.broadcast %26 : vector<1x1xf32> to vector<16x128xf32>
    %34 = arith.mulf %0, %33 : vector<16x128xf32>
    %35 = vector.broadcast %30 : vector<1x1xf32> to vector<16x128xf32>
    %36 = arith.subf %34, %35 : vector<16x128xf32>
    %37 = math.roundeven %36 : vector<16x128xf32>
    %cst_11 = arith.constant -1.280000e+02 : f32
    %cst_12 = arith.constant 1.270000e+02 : f32
    %38 = vector.broadcast %cst_11 : f32 to vector<16x128xf32>
    %39 = arith.maximumf %38, %37 : vector<16x128xf32>
    %40 = vector.broadcast %cst_12 : f32 to vector<16x128xf32>
    %41 = arith.minimumf %40, %39 : vector<16x128xf32>
    %42 = vector.broadcast %30 : vector<1x1xf32> to vector<16x128xf32>
    %43 = arith.addf %41, %42 : vector<16x128xf32>
    %44 = vector.broadcast %32 : vector<1x1xf32> to vector<16x128xf32>
    %45 = arith.mulf %43, %44 : vector<16x128xf32>
    %c0_13 = arith.constant 0 : index
    %c0_14 = arith.constant 0 : index
    %46 = vector.load %arg3[%c0_13, %c0_14] : memref<16x128xf32, #tpu.memory_space<vmem>>, vector<16x128xf32>
    tpu.vector_store %arg3[%c0_13, %c0_14], %45 {strides = array<i32>} : memref<16x128xf32, #tpu.memory_space<vmem>>, vector<16x128xf32>,
    return
  }
  func.func @transform_0(%arg0: i32) -> i32 {
    %c0_i32 = arith.constant 0 : i32
    %c0_i32_0 = arith.constant 0 : i32
    return %c0_i32 : i32
  }
  func.func @transform_1(%arg0: i32) -> (i32, i32) {
    %c0_i32 = arith.constant 0 : i32
    %c0_i32_0 = arith.constant 0 : i32
    %c0_i32_1 = arith.constant 0 : i32
    return %c0_i32, %c0_i32_0 : i32, i32
  }
  func.func @transform_2(%arg0: i32) -> (i32, i32) {
    %c0_i32 = arith.constant 0 : i32
    %c0_i32_0 = arith.constant 0 : i32
    %c0_i32_1 = arith.constant 0 : i32
    return %c0_i32, %c0_i32_0 : i32, i32
  }
  func.func @transform_3(%arg0: i32) -> (i32, i32) {
    %c0_i32 = arith.constant 0 : i32
    %c0_i32_0 = arith.constant 0 : i32
    %c0_i32_1 = arith.constant 0 : i32
    return %c0_i32, %c0_i32_0 : i32, i32
  }
  func.func @transform_4(%arg0: i32) -> (i32, i32) {
    %c0_i32 = arith.constant 0 : i32
    %c0_i32_0 = arith.constant 0 : i32
    %c0_i32_1 = arith.constant 0 : i32
    return %c0_i32, %c0_i32_0 : i32, i32
  }
}

</mosaic_0001>

<llo_original>
// kernel: tpu_custom_call.1
$region0: #{tpu_custom_call.1}
  #allocation0 [shape = 'u32[]', space=smem, size = 0x4, offset = 0x4, fixed_abs, tag = 'smem constant byte address 0x4 - core index']
  #allocation1 [shape = 'u32[144,128]{1,0:T(1,128)}', space=vmem, size = 0x12000, scoped, tag = 'internal scratch']
  %s0 = inlined_call_operand.hbm [shape: f32[2], index: 0, kind: input, shape index: {}]
  %s1 = inlined_call_operand.hbm [shape: f32[16,128], index: 1, kind: input, shape index: {}]
  %s2 = inlined_call_operand.hbm [shape: f32[16,128], index: 2, kind: output, shape index: {0}]
  %s3 = inlined_call_operand.hbm [shape: f32[1,1], index: 3, kind: output, shape index: {1}]
  %s4 = inlined_call_operand.hbm [shape: f32[1,1], index: 4, kind: output, shape index: {2}]
  %5 = xla_tuple %s2, %s3, %s4
  %s6 = sld [smem:[#allocation0]]
  $region42: #{tpu_custom_call.1} parent=0
    _
  %s8 = ssub.s32 1, %s6
  %s9 = scalar_select 0, %s8, %s6
  $region1: #{tpu_custom_call.1} parent=0
    #allocation2 [shape = 'u8[512]{0}', space=smem, size = 0x200, scoped, tag = 'input window, operand 0, single buffered']
    #allocation3 [shape = 's32[1]{0}', space=sflag, size = 0x4, scoped, tag = 'scoped memory for tpu_custom_call.1']
    #allocation4 [shape = 's32[1]{0}', space=sflag, size = 0x4, scoped, tag = 'scoped memory for tpu_custom_call.1']
    #allocation5 [shape = 's32[1]{0}', space=sflag, size = 0x4, scoped, tag = 'scoped memory for tpu_custom_call.1']
    #allocation6 [shape = 'u8[8192]{0}', space=vmem, size = 0x2000, scoped, tag = 'input window, operand 1, single buffered']
    #allocation7 [shape = 'u8[8192]{0}', space=vmem, size = 0x2000, scoped, tag = 'output window, operand 0, single buffered']
    #allocation8 [shape = 'u8[512]{0}', space=vmem, size = 0x400, scoped, tag = 'output window, operand 1, single buffered']
    #allocation9 [shape = 's32[1]{0}', space=sflag, size = 0x4, scoped, tag = 'scoped memory for tpu_custom_call.1']
    #allocation10 [shape = 'u8[512]{0}', space=vmem, size = 0x400, scoped, tag = 'output window, operand 2, single buffered']
    %10 = vsyncpa [#allocation5], 0
    %11 = vsyncpa [#allocation3], 0
    %12 = vsyncpa [#allocation4], 0
    %13 = vsyncpa [#allocation9], 0
    // Predicated region
    $region2: #{tpu_custom_call.1} parent=1 // pred_check
      _
    $region3: #{tpu_custom_call.1} parent=1 // pred_check_branch
      %15 = sbr.rel (0) target = $region5
    $region4: #{tpu_custom_call.1} parent=1 // pred_region
      %s17 = ssub.s32 16, 16
      %18 = vsyncadd [#allocation5], %s17
      %21 = dma.hbm_to_smem %s0, 16, [#allocation2], [#allocation5]
    $region5: #{tpu_custom_call.1} parent=1 // pred_fallthru
      _
    // Predicated region
    $region6: #{tpu_custom_call.1} parent=1 // pred_check
      _
    $region7: #{tpu_custom_call.1} parent=1 // pred_check_branch
      %23 = sbr.rel (0) target = $region9
    $region8: #{tpu_custom_call.1} parent=1 // pred_region
      %s25 = ssub.s32 256, 256
      %26 = vsyncadd [#allocation3], %s25
      %s27 = sshll.u32 [#allocation6], 4
      %s28 = int_to_ptr.vmem [resolvable:$true] %s27
      %33 = dma.hbm_to_vmem [thread:$0]  %s1, 256, %s28, [#allocation3], 128, 128, 8
    $region9: #{tpu_custom_call.1} parent=1 // pred_fallthru
      _
    // Predicated region
    $region10: #{tpu_custom_call.1} parent=1 // pred_check
      _
    $region11: #{tpu_custom_call.1} parent=1 // pred_check_branch
      %35 = sbr.rel (0) target = $region13
    $region12: #{tpu_custom_call.1} parent=1 // pred_region
      %36 = dma.done [#allocation5], 16
    $region13: #{tpu_custom_call.1} parent=1 // pred_fallthru
      _
    // Predicated region
    $region14: #{tpu_custom_call.1} parent=1 // pred_check
      _
    $region15: #{tpu_custom_call.1} parent=1 // pred_check_branch
      %38 = sbr.rel (0) target = $region17
    $region16: #{tpu_custom_call.1} parent=1 // pred_region
      %39 = dma.done [#allocation3], 256
    $region17: #{tpu_custom_call.1} parent=1 // pred_fallthru
      _
    %40 = sfence
    %v41 = vld [vmem:[#allocation6] sm:$0xff]
    %v42 = vld [vmem:[#allocation6 + $0x8] sm:$0xff]
    %v43 = vmin.f32 %v41, %v42
    %44 = vmin.xlane.f32.xlu0 %v43
    %v45 = vpop.xlane.xlu0 %44
    %v46 = vrot.slane %v45, 4
    %v47 = vmin.f32 %v45, %v46
    %v48 = vrot.slane %v47, 2
    %v49 = vmin.f32 %v47, %v48
    %v50 = vrot.slane %v49, 1
    %v51 = vmin.f32 %v49, %v50
    %s52 = vtos %v51
    %v53 = vstv %s52
    %v54 = vmax.f32 %v41, %v42
    %55 = vmax.xlane.f32.xlu0 %v54
    %v56 = vpop.xlane.xlu0 %55
    %v57 = vrot.slane %v56, 4
    %v58 = vmax.f32 %v56, %v57
    %v59 = vrot.slane %v58, 2
    %v60 = vmax.f32 %v58, %v59
    %v61 = vrot.slane %v60, 1
    %v62 = vmax.f32 %v60, %v61
    %s63 = vtos %v62
    %v64 = vstv %s63
    %s65 = sld [smem:[#allocation2]]
    %s66 = sld [smem:[#allocation2 + $0x1]]
    %v67 = vstv %s65
    %v68 = vmin.f32 %v53, %v67
    %v69 = vstv %s66
    %v70 = vmax.f32 %v64, %v69
    %vm71 = vcmask 0
    %72 = vst.msk [vmem:[#allocation8] sm:$0x1] %vm71, %v68
    %73 = vst.msk [vmem:[#allocation10] sm:$0x1] %vm71, %v70
    %vm74 = vcmp.eq.f32.partialorder %v68, %v70
    %v75 = vsel %vm74, %v53, %v68
    %v76 = vsel %vm74, %v64, %v70
    %v77 = vsub.f32 %v76, %v75
    %v78 = vmax.f32 %v77, 1e-08
    %v79 = vrcp.pop %v78
    %v80 = vmul.f32 255.0, %v79
    %v81 = vmul.f32 %v80, %v75
    %v82 = vround.ne.pseudo %v81
    %v83 = vadd.f32 %v82, 128.0
    %v84 = vrcp.pop 255.0
    %v85 = vmul.f32 %v78, %v84
    %v86 = vmul.f32 %v41, %v80
    %v87 = vmul.f32 %v42, %v80
    %v88 = vsub.f32 %v86, %v83
    %v89 = vsub.f32 %v87, %v83
    %v90 = vround.ne.pseudo %v88
    %v91 = vround.ne.pseudo %v89
    %v92 = vmax.f32 %v90, -128.0
    %v93 = vmax.f32 %v91, -128.0
    %v94 = vmin.f32 %v92, 127.0
    %v95 = vmin.f32 %v93, 127.0
    %v96 = vadd.f32 %v94, %v83
    %v97 = vadd.f32 %v95, %v83
    %v98 = vmul.f32 %v96, %v85
    %v99 = vmul.f32 %v97, %v85
    %100 = vst [vmem:[#allocation7] sm:$0xff] %v98
    %101 = vst [vmem:[#allocation7 + $0x8] sm:$0xff] %v99
    // Predicated region
    $region18: #{tpu_custom_call.1} parent=1 // pred_check
      _
    $region19: #{tpu_custom_call.1} parent=1 // pred_check_branch
      %103 = sbr.rel (0) target = $region21
    $region20: #{tpu_custom_call.1} parent=1 // pred_region
      %s105 = ssub.s32 256, 256
      %106 = vsyncadd [#allocation4], %s105
      %s107 = sshll.u32 [#allocation7], 4
      %s108 = int_to_ptr.vmem [resolvable:$true] %s107
      %113 = dma.vmem_to_hbm [thread:$0]  %s108, 256, %s2, [#allocation4], 128, 128, 8
    $region21: #{tpu_custom_call.1} parent=1 // pred_fallthru
      _
    // Predicated region
    $region22: #{tpu_custom_call.1} parent=1 // pred_check
      _
    $region23: #{tpu_custom_call.1} parent=1 // pred_check_branch
      %115 = sbr.rel (0) target = $region25
    $region24: #{tpu_custom_call.1} parent=1 // pred_region
      %s117 = ssub.s32 16, 16
      %118 = vsyncadd [#allocation9], %s117
      %s120 = sshll.u32 [#allocation8], 4
      %s121 = int_to_ptr.vmem [resolvable:$true] %s120
      %123 = dma.vmem_to_hbm [thread:$0]  %s121, 16, %s3, [#allocation9]
    $region25: #{tpu_custom_call.1} parent=1 // pred_fallthru
      _
    // Predicated region
    $region26: #{tpu_custom_call.1} parent=1 // pred_check
      _
    $region27: #{tpu_custom_call.1} parent=1 // pred_check_branch
      %125 = sbr.rel (0) target = $region29
    $region28: #{tpu_custom_call.1} parent=1 // pred_region
      %s127 = ssub.s32 16, 16
      %128 = vsyncadd [#allocation9], %s127
      %s130 = sshll.u32 [#allocation10], 4
      %s131 = int_to_ptr.vmem [resolvable:$true] %s130
      %133 = dma.vmem_to_hbm [thread:$0]  %s131, 16, %s4, [#allocation9]
    $region29: #{tpu_custom_call.1} parent=1 // pred_fallthru
      _
    // Predicated region
    $region30: #{tpu_custom_call.1} parent=1 // pred_check
      _
    $region31: #{tpu_custom_call.1} parent=1 // pred_check_branch
      %135 = sbr.rel (0) target = $region33
    $region32: #{tpu_custom_call.1} parent=1 // pred_region
      %136 = dma.done [#allocation4], 256
    $region33: #{tpu_custom_call.1} parent=1 // pred_fallthru
      _
    // Predicated region
    $region34: #{tpu_custom_call.1} parent=1 // pred_check
      _
    $region35: #{tpu_custom_call.1} parent=1 // pred_check_branch
      %138 = sbr.rel (0) target = $region37
    $region36: #{tpu_custom_call.1} parent=1 // pred_region
      %139 = dma.done [#allocation9], 16
    $region37: #{tpu_custom_call.1} parent=1 // pred_fallthru
      _
    // Predicated region
    $region38: #{tpu_custom_call.1} parent=1 // pred_check
      _
    $region39: #{tpu_custom_call.1} parent=1 // pred_check_branch
      %141 = sbr.rel (0) target = $region41
    $region40: #{tpu_custom_call.1} parent=1 // pred_region
      %142 = dma.done [#allocation9], 16
    $region41: #{tpu_custom_call.1} parent=1 // pred_fallthru
      _
    %143 = vsyncpa [#allocation3], 1
    %144 = vsyncpa [#allocation4], 1
    %145 = vsyncpa [#allocation9], 1
    %146 = vsyncpa [#allocation5], 1

</llo_original>
